<compile_context>
chip_gen: v6e
topology: v6e:2x2x1
jax: 0.10.0
libtpu: 0.0.40
codegen_flags: <defaults>
</compile_context>

<pallas_src>
import functools

import jax
import jax.numpy as jnp
from jax.experimental import pallas as pl
from jax.experimental.pallas import tpu as pltpu


def stem_pool_kernel(x_ref, wct_ref, bct_ref, out_ref, acc_ref, *,
                     hw_total, hw_tile):
    # x_ref  : (1, C, hw_tile) f32   one HW tile of one batch element (lane-dense)
    # wct_ref: (F, C)          bf16  1x1-conv weights, transposed ("backbone" stem)
    # bct_ref: (F, 1)          f32   stem bias (column)
    # out_ref: (1, F, 1)       f32   pooled (mean) features for this batch element
    # acc_ref: (F, 128)        f32   running pooled partial sums (VMEM scratch)
    t = pl.program_id(1)

    @pl.when(t == 0)
    def _init():
        acc_ref[...] = jnp.zeros_like(acc_ref)

    # cast in-kernel (no separate XLA pass over x in HBM).
    xt = x_ref[0].astype(jnp.bfloat16)                          # [C, hw_tile]

    # "backbone" stem: 1x1 conv as an MXU matmul, f32 accumulation.
    feat = jnp.dot(wct_ref[...], xt,
                   preferred_element_type=jnp.float32)          # [F, hw_tile]
    feat = jnp.maximum(feat + bct_ref[...], 0.0)                # bias + ReLU (f32)

    # mask out-of-range pixels of the last (partial) HW tile.
    if hw_total % hw_tile != 0:
        pos = t * hw_tile + jax.lax.broadcasted_iota(
            jnp.int32, (1, hw_tile), 1)
        feat = jnp.where(pos < hw_total, feat, 0.0)

    # fold the tile into [F, 128] with plain VALU vreg adds (aligned lane slices);
    # the single cross-lane reduce is deferred to the finalize step.
    partial = feat[:, 0:128]
    for g in range(1, hw_tile // 128):
        partial = partial + feat[:, g * 128:(g + 1) * 128]
    acc_ref[...] += partial

    @pl.when(t == pl.num_programs(1) - 1)
    def _finalize():
        pooled = jnp.sum(acc_ref[...], axis=-1, keepdims=True) * (1.0 / hw_total)
        out_ref[...] = pooled[None].astype(out_ref.dtype)       # (1, F, 1)


def _pick_hw_tile(hw, f):
    """Largest 128-multiple HW tile that keeps the f32 feat temp small, with a
    generation-aware cap (v7x: 64 MiB VMEM -> cap 1024; v5e/v6e: cap 2048)."""
    try:
        vmem_bytes = pltpu.get_tpu_info().vmem_capacity_bytes
    except Exception:
        vmem_bytes = 64 * 1024 * 1024
    cap = 2048 if vmem_bytes > 64 * 1024 * 1024 else 1024
    budget_rows = (8 * 1024 * 1024) // (4 * max(f, 1))     # keep feat temp <= ~8 MiB
    tile = max(128, min(cap, (budget_rows // 128) * 128))
    hw_up = ((hw + 127) // 128) * 128                      # no point exceeding HW
    return max(128, min(tile, hw_up))


def idc_grading_forward(x_nchw, params, hw_tile=None):
    """x_nchw: [B, C, H, W] float32 (PyTorch layout). Returns logits [B, 4]."""
    wc, bc, w1, b1, w2, b2 = params
    B, C, H, W = x_nchw.shape
    HW = H * W
    F = wc.shape[1]

    if hw_tile is None:
        hw_tile = _pick_hw_tile(HW, F)
    n_hw = pl.cdiv(HW, hw_tile)

    # Free, contiguous reshape — no transpose, no cast, no extra HBM pass over x.
    x = x_nchw.reshape(B, C, HW)
    # Tiny constant stem weights: transpose/cast on the host is negligible.
    wct = jnp.transpose(wc).astype(jnp.bfloat16)            # [F, C]
    bct = jnp.reshape(bc, (F, 1)).astype(jnp.float32)       # [F, 1]

    kernel = functools.partial(stem_pool_kernel, hw_total=HW, hw_tile=hw_tile)

    grid_spec = pltpu.PrefetchScalarGridSpec(
        num_scalar_prefetch=0,
        grid=(B, n_hw),
        in_specs=[
            pl.BlockSpec((1, C, hw_tile), lambda b, t: (b, 0, t)),   # x tile
            pl.BlockSpec((F, C), lambda b, t: (0, 0)),               # wc^T (const)
            pl.BlockSpec((F, 1), lambda b, t: (0, 0)),               # bc^T (const)
        ],
        out_specs=pl.BlockSpec((1, F, 1), lambda b, t: (b, 0, 0)),
        scratch_shapes=[pltpu.VMEM((F, 128), jnp.float32)],          # partial sums
    )

    pooled3 = pl.pallas_call(
        kernel,
        out_shape=jax.ShapeDtypeStruct((B, F, 1), jnp.float32),
        grid_spec=grid_spec,
        compiler_params=pltpu.CompilerParams(
            dimension_semantics=("parallel", "arbitrary"),
            # raise the scoped-VMEM limit explicitly (v5e default is only 16 MiB);
            # 48 MiB stays under v7x's 64 MiB physical budget.
            vmem_limit_bytes=48 * 1024 * 1024),
    )(x, wct, bct)

    pooled = pooled3[:, :, 0]                                # [B, F] f32 (mean)

    # Classifier head (Dropouts are identity in eval mode), hoisted out of the
    # kernel per the perf review: one batched [B,F]@[F,256]@[256,4] MXU matmul
    # chain in plain XLA (bf16 inputs, f32 accumulation).
    h = jnp.maximum(
        jnp.dot(pooled.astype(jnp.bfloat16), w1.astype(jnp.bfloat16),
                preferred_element_type=jnp.float32) + b1, 0.0)
    logits = jnp.dot(h.astype(jnp.bfloat16), w2.astype(jnp.bfloat16),
                     preferred_element_type=jnp.float32) + b2
    return logits


def reference_forward(x_nchw, params):
    """Pure-JAX reference with the same bf16 quantization as the kernel path."""
    wc, bc, w1, b1, w2, b2 = params
    B, C, H, W = x_nchw.shape
    bf = lambda a: a.astype(jnp.bfloat16).astype(jnp.float32)
    pp = jax.lax.Precision.HIGHEST
    x = jnp.transpose(x_nchw, (0, 2, 3, 1)).reshape(B, H * W, C)
    feat = jnp.maximum(
        jnp.einsum('bpc,cf->bpf', bf(x), bf(wc), precision=pp) + bc, 0.0)
    pooled = jnp.mean(feat, axis=1)                                  # [B, F] f32
    h = jnp.maximum(jnp.matmul(bf(pooled), bf(w1), precision=pp) + b1, 0.0)
    return jnp.matmul(bf(h), bf(w2), precision=pp) + b2


def init_params(key, c_in, num_ftrs):
    k = jax.random.split(key, 6)
    scale = 0.05
    wc = scale * jax.random.normal(k[0], (c_in, num_ftrs), jnp.float32)
    bc = scale * jax.random.normal(k[1], (1, num_ftrs), jnp.float32)
    w1 = scale * jax.random.normal(k[2], (num_ftrs, 256), jnp.float32)
    b1 = scale * jax.random.normal(k[3], (1, 256), jnp.float32)
    w2 = scale * jax.random.normal(k[4], (256, 4), jnp.float32)
    b2 = scale * jax.random.normal(k[5], (1, 4), jnp.float32)
    return (wc, bc, w1, b1, w2, b2)


if __name__ == "__main__":
    key = jax.random.PRNGKey(0)
    kx, kp = jax.random.split(key)

    B, C, H, W = 2, 3, 16, 16      # small RGB images (backbone expects 3 channels)
    NUM_FTRS = 128                 # synthetic backbone feature width

    x = jax.random.normal(kx, (B, C, H, W), jnp.float32)
    params = init_params(kp, C, NUM_FTRS)

    # Case 1: HW divisible by the tile (exercises multi-tile streaming + accumulate).
    logits = jax.block_until_ready(idc_grading_forward(x, params, hw_tile=128))
    ref = reference_forward(x, params)
    assert logits.shape == (B, 4)
    assert jnp.allclose(logits, ref, atol=2e-3, rtol=2e-3), (logits, ref)

    # Case 2: HW not divisible by the tile (exercises the in-kernel mask path).
    x2 = jax.random.normal(kx, (B, C, 18, 18), jnp.float32)   # HW = 324
    logits2 = jax.block_until_ready(idc_grading_forward(x2, params, hw_tile=128))
    ref2 = reference_forward(x2, params)
    assert jnp.allclose(logits2, ref2, atol=2e-3, rtol=2e-3), (logits2, ref2)

    print("KERNEL_OK")
</pallas_src>

<mosaic_0001>
module attributes {stable_mosaic.version = 11 : i64} {
  func.func @stem_pool_kernel(%arg0: i32, %arg1: i32, %arg2: memref<1x3x128xf32, #tpu.memory_space<vmem>>, %arg3: memref<128x3xbf16, #tpu.memory_space<vmem>>, %arg4: memref<128x1xf32, #tpu.memory_space<vmem>>, %arg5: memref<1x128x1xf32, #tpu.memory_space<vmem>>, %arg6: memref<128x128xf32, #tpu.memory_space<vmem>>) attributes {dimension_semantics = [#tpu.dimension_semantics<parallel>, #tpu.dimension_semantics<arbitrary>], iteration_bounds = array<i64: 2, 2>, scalar_prefetch = 0 : i64, scratch_operands = 1 : i64, tpu.core_type = #tpu.core_type<tc>, window_params = [{transform_indices = @transform_0, window_bounds = array<i64: 1, 3, 128>}, {pipeline_mode = #tpu.pipeline_mode<synchronous>, transform_indices = @transform_1, window_bounds = array<i64: 128, 3>}, {pipeline_mode = #tpu.pipeline_mode<synchronous>, transform_indices = @transform_2, window_bounds = array<i64: 128, 1>}, {transform_indices = @transform_3, window_bounds = array<i64: 1, 128, 1>}]} {
    %c0_i32 = arith.constant 0 : i32
    %0 = arith.cmpi eq, %arg1, %c0_i32 : i32
    %1 = arith.extui %0 : i1 to i32
    %c0_i32_0 = arith.constant 0 : i32
    %2 = arith.cmpi ne, %1, %c0_i32_0 : i32
    scf.if %2 {
      %cst_13 = arith.constant 0.000000e+00 : f32
      %19 = vector.broadcast %cst_13 : f32 to vector<128x128xf32>
      %c0_14 = arith.constant 0 : index
      %c0_15 = arith.constant 0 : index
      %20 = vector.load %arg6[%c0_14, %c0_15] : memref<128x128xf32, #tpu.memory_space<vmem>>, vector<128x128xf32>
      tpu.vector_store %arg6[%c0_14, %c0_15], %19 {strides = array<i32>} : memref<128x128xf32, #tpu.memory_space<vmem>>, vector<128x128xf32>,
    } else {
    }
    %c0 = arith.constant 0 : index
    %c0_1 = arith.constant 0 : index
    %c0_2 = arith.constant 0 : index
    %3 = vector.load %arg2[%c0, %c0_1, %c0_2] : memref<1x3x128xf32, #tpu.memory_space<vmem>>, vector<1x3x128xf32>
    %4 = vector.shape_cast %3 : vector<1x3x128xf32> to vector<3x128xf32>
    %5 = arith.truncf %4 : vector<3x128xf32> to vector<3x128xbf16>
    %c0_3 = arith.constant 0 : index
    %c0_4 = arith.constant 0 : index
    %6 = vector.load %arg3[%c0_3, %c0_4] : memref<128x3xbf16, #tpu.memory_space<vmem>>, vector<128x3xbf16>
    %cst = arith.constant dense<0.000000e+00> : vector<128x128xf32>
    %7 = tpu.matmul %6, %5, %cst {dimension_numbers = #tpu.dot_dimension_numbers<[1], [0], [0], [1], [0, 0, 1, 1], [], []>} : vector<128x3xbf16>, vector<3x128xbf16>, vector<128x128xf32> -> vector<128x128xf32>
    %c0_5 = arith.constant 0 : index
    %c0_6 = arith.constant 0 : index
    %8 = vector.load %arg4[%c0_5, %c0_6] : memref<128x1xf32, #tpu.memory_space<vmem>>, vector<128x1xf32>
    %9 = vector.broadcast %8 : vector<128x1xf32> to vector<128x128xf32>
    %10 = arith.addf %7, %9 : vector<128x128xf32>
    %cst_7 = arith.constant 0.000000e+00 : f32
    %11 = vector.broadcast %cst_7 : f32 to vector<128x128xf32>
    %12 = arith.maximumf %10, %11 : vector<128x128xf32>
    %c0_8 = arith.constant 0 : index
    %c0_9 = arith.constant 0 : index
    %13 = vector.load %arg6[%c0_8, %c0_9] : memref<128x128xf32, #tpu.memory_space<vmem>>, vector<128x128xf32>
    %14 = arith.addf %13, %12 : vector<128x128xf32>
    %c0_10 = arith.constant 0 : index
    %c0_11 = arith.constant 0 : index
    %15 = vector.load %arg6[%c0_10, %c0_11] : memref<128x128xf32, #tpu.memory_space<vmem>>, vector<128x128xf32>
    tpu.vector_store %arg6[%c0_10, %c0_11], %14 {strides = array<i32>} : memref<128x128xf32, #tpu.memory_space<vmem>>, vector<128x128xf32>,
    %c1_i32 = arith.constant 1 : i32
    %16 = arith.cmpi eq, %arg1, %c1_i32 : i32
    %17 = arith.extui %16 : i1 to i32
    %c0_i32_12 = arith.constant 0 : i32
    %18 = arith.cmpi ne, %17, %c0_i32_12 : i32
    scf.if %18 {
      %c0_13 = arith.constant 0 : index
      %c0_14 = arith.constant 0 : index
      %19 = vector.load %arg6[%c0_13, %c0_14] : memref<128x128xf32, #tpu.memory_space<vmem>>, vector<128x128xf32>
      %cst_15 = arith.constant dense<0.000000e+00> : vector<128xf32>
      %20 = vector.multi_reduction <add>, %19, %cst_15 [1] : vector<128x128xf32> to vector<128xf32>
      %21 = vector.shape_cast %20 : vector<128xf32> to vector<128x1xf32>
      %cst_16 = arith.constant 3.906250e-03 : f32
      %22 = vector.broadcast %cst_16 : f32 to vector<128x1xf32>
      %23 = arith.mulf %21, %22 : vector<128x1xf32>
      %24 = vector.shape_cast %23 : vector<128x1xf32> to vector<1x128x1xf32>
      %c0_17 = arith.constant 0 : index
      %c0_18 = arith.constant 0 : index
      %c0_19 = arith.constant 0 : index
      %25 = vector.load %arg5[%c0_17, %c0_18, %c0_19] : memref<1x128x1xf32, #tpu.memory_space<vmem>>, vector<1x128x1xf32>
      tpu.vector_store %arg5[%c0_17, %c0_18, %c0_19], %24 {strides = array<i32>} : memref<1x128x1xf32, #tpu.memory_space<vmem>>, vector<1x128x1xf32>,
    } else {
    }
    return
  }
  func.func @transform_0(%arg0: i32, %arg1: i32) -> (i32, i32, i32) {
    %c0_i32 = arith.constant 0 : i32
    %c0_i32_0 = arith.constant 0 : i32
    return %arg0, %c0_i32, %arg1 : i32, i32, i32
  }
  func.func @transform_1(%arg0: i32, %arg1: i32) -> (i32, i32) {
    %c0_i32 = arith.constant 0 : i32
    %c0_i32_0 = arith.constant 0 : i32
    %c0_i32_1 = arith.constant 0 : i32
    return %c0_i32, %c0_i32_0 : i32, i32
  }
  func.func @transform_2(%arg0: i32, %arg1: i32) -> (i32, i32) {
    %c0_i32 = arith.constant 0 : i32
    %c0_i32_0 = arith.constant 0 : i32
    %c0_i32_1 = arith.constant 0 : i32
    return %c0_i32, %c0_i32_0 : i32, i32
  }
  func.func @transform_3(%arg0: i32, %arg1: i32) -> (i32, i32, i32) {
    %c0_i32 = arith.constant 0 : i32
    %c0_i32_0 = arith.constant 0 : i32
    %c0_i32_1 = arith.constant 0 : i32
    return %arg0, %c0_i32, %c0_i32_0 : i32, i32, i32
  }
}

</mosaic_0001>

<llo_original>
// kernel: tpu_custom_call.1
$region0: #{tpu_custom_call.1}
  #allocation0 [shape = 'u32[]', space=smem, size = 0x4, offset = 0x4, fixed_abs, tag = 'smem constant byte address 0x4 - core index']
  #allocation1 [shape = 'u32[144,128]{1,0:T(1,128)}', space=vmem, size = 0x12000, scoped, tag = 'internal scratch']
  #allocation2 [shape = 'f32[128,128]{1,0:T(8,128)}', space=vmem, size = 0x10000, scoped, tag = 'scratch operand']
  %s0 = inlined_call_operand.vmem [shape: f32[2,3,256], index: 0, kind: input, shape index: {}]
  %s1 = inlined_call_operand.vmem [shape: bf16[128,3], index: 1, kind: input, shape index: {}]
  %s2 = inlined_call_operand.vmem [shape: f32[128,1], index: 2, kind: input, shape index: {}]
  %s3 = inlined_call_operand.vmem [shape: f32[2,128,1], index: 3, kind: output, shape index: {}]
  %s4 = sld [smem:[#allocation0]]
  $region53: #{tpu_custom_call.1} parent=0
    _
  %s6 = ssub.s32 1, %s4
  %s7 = scalar_select 0, %s6, %s4
  loop: start=0, step=1, limit=6
  $region2: #{tpu_custom_call.1} parent=0 // loop_pre_header
    _
  $region3: #{tpu_custom_call.1} parent=0 // loop_header
    %s9 = sphi 0, %s13
    %p10 = scmp.ge.s32.totalorder %s9, 6
    %s16 = sphi 0, %s28
    %s17 = sphi 0, %s24
    %s18 = sphi 0, %s16
    %s19 = sphi 0, %s17
    %s20 = sphi 0, %s18
    %s21 = sphi 0, %s19
    %s33 = sphi 0, %s35
    %s36 = sphi 0, %s33
    %s37 = sphi 0, %s36
    %s53 = sphi 0, %s37
    %s57 = sphi 0, %s57
    %s59 = sphi 0, %s57
    %s60 = sphi 0, %s59
    %s74 = sphi 0, %s60
    %s78 = sphi 0, %s78
    %s80 = sphi 0, %s78
    %s81 = sphi 0, %s80
    %s95 = sphi 0, %s81
    %s101 = sphi 0, %s103
    %s104 = sphi 0, %s101
    %s105 = sphi 0, %s104
    %s121 = sphi 0, %s105
  $region4: #{tpu_custom_call.1} parent=0 // loop_header_branch
    %12 = sbr.rel (%p10) target = $region8
  $region5: #{tpu_custom_call.1} parent=0 // loop_body
    %s14 = ssub.s32 %s9, 1
    %s15 = ssub.s32 %s9, 2
    %s22 = sadd.s32 1, %s17
    %p23 = scmp.ge.s32.totalorder %s22, 2
    %s24 = scalar_select %p23, 0, %s22
    %s25 = sadd.s32 1, %s16
    %s26 = scalar_select %p23, %s25, %s16
    %p27 = scmp.ge.s32.totalorder %s26, 2
    %s28 = scalar_select %p27, 0, %s26
    %s29 = ssub.s32 %s16, %s28
    %s30 = ssub.s32 %s17, %s24
    %s31 = sor.u32 %s29, %s30
    %p32 = scmp.eq.s32.totalorder %s31, 0
    %s34 = sadd.s32 %s33, 1
    %s35 = scalar_select %p32, %s33, %s34
    %p38 = pneg %p32
    %p39 = scmp.eq.s32.totalorder %s9, 3
    %p40 = por %p38, %p39
    %p41 = scmp.ne.s32.totalorder %s33, %s36
    %p42 = scmp.eq.s32.totalorder %s9, 0
    %p43 = por %p41, %p42
    %p44 = scmp.ne.s32.totalorder %s33, %s36
    %p45 = scmp.eq.s32.totalorder %s14, 3
    %p46 = por %p44, %p45
    %p47 = scmp.ne.s32.totalorder %s36, %s37
    %p48 = scmp.eq.s32.totalorder %s14, 0
    %p49 = por %p47, %p48
    %p50 = scmp.ne.s32.totalorder %s36, %s37
    %p51 = scmp.eq.s32.totalorder %s15, 3
    %p52 = por %p50, %p51
    %p54 = scmp.ne.s32.totalorder %s37, %s53
    %p55 = scmp.eq.s32.totalorder %s15, 0
    %p56 = por %p54, %p55
    %s58 = sadd.s32 %s57, 1
    %p61 = scmp.eq.s32.totalorder %s9, 3
    %p62 = scmp.ne.s32.totalorder %s57, %s59
    %p63 = scmp.eq.s32.totalorder %s9, 0
    %p64 = por %p62, %p63
    %p65 = scmp.ne.s32.totalorder %s57, %s59
    %p66 = scmp.eq.s32.totalorder %s14, 3
    %p67 = por %p65, %p66
    %p68 = scmp.ne.s32.totalorder %s59, %s60
    %p69 = scmp.eq.s32.totalorder %s14, 0
    %p70 = por %p68, %p69
    %p71 = scmp.ne.s32.totalorder %s59, %s60
    %p72 = scmp.eq.s32.totalorder %s15, 3
    %p73 = por %p71, %p72
    %p75 = scmp.ne.s32.totalorder %s60, %s74
    %p76 = scmp.eq.s32.totalorder %s15, 0
    %p77 = por %p75, %p76
    %s79 = sadd.s32 %s78, 1
    %p82 = scmp.eq.s32.totalorder %s9, 3
    %p83 = scmp.ne.s32.totalorder %s78, %s80
    %p84 = scmp.eq.s32.totalorder %s9, 0
    %p85 = por %p83, %p84
    %p86 = scmp.ne.s32.totalorder %s78, %s80
    %p87 = scmp.eq.s32.totalorder %s14, 3
    %p88 = por %p86, %p87
    %p89 = scmp.ne.s32.totalorder %s80, %s81
    %p90 = scmp.eq.s32.totalorder %s14, 0
    %p91 = por %p89, %p90
    %p92 = scmp.ne.s32.totalorder %s80, %s81
    %p93 = scmp.eq.s32.totalorder %s15, 3
    %p94 = por %p92, %p93
    %p96 = scmp.ne.s32.totalorder %s81, %s95
    %p97 = scmp.eq.s32.totalorder %s15, 0
    %p98 = por %p96, %p97
    %s99 = ssub.s32 %s16, %s28
    %p100 = scmp.eq.s32.totalorder %s99, 0
    %s102 = sadd.s32 %s101, 1
    %s103 = scalar_select %p100, %s101, %s102
    %p106 = pneg %p100
    %p107 = scmp.eq.s32.totalorder %s9, 3
    %p108 = por %p106, %p107
    %p109 = scmp.ne.s32.totalorder %s101, %s104
    %p110 = scmp.eq.s32.totalorder %s9, 0
    %p111 = por %p109, %p110
    %p112 = scmp.ne.s32.totalorder %s101, %s104
    %p113 = scmp.eq.s32.totalorder %s14, 3
    %p114 = por %p112, %p113
    %p115 = scmp.ne.s32.totalorder %s104, %s105
    %p116 = scmp.eq.s32.totalorder %s14, 0
    %p117 = por %p115, %p116
    %p118 = scmp.ne.s32.totalorder %s104, %s105
    %p119 = scmp.eq.s32.totalorder %s15, 3
    %p120 = por %p118, %p119
    %p122 = scmp.ne.s32.totalorder %s105, %s121
    %p123 = scmp.eq.s32.totalorder %s15, 0
    %p124 = por %p122, %p123
    %p125 = scmp.le.s32.totalorder 1, %s9
    %p126 = scmp.lt.s32.totalorder %s9, 5
    %p127 = pnand %p125, %p126
    %p128 = pneg %p127
    // Predicated region
    $region9: #{tpu_custom_call.1} parent=5 // pred_check
      _
    $region10: #{tpu_custom_call.1} parent=5 // pred_check_branch
      %130 = sbr.rel (%p127) target = $region12
    $region11: #{tpu_custom_call.1} parent=5 // pred_region
      %s131 = ssub.s32 %s9, 1
      // Predicated region
      $region13: #{tpu_custom_call.1} parent=11 // pred_check
        %p132 = pneg %p70
      $region14: #{tpu_custom_call.1} parent=11 // pred_check_branch
        %134 = sbr.rel (%p132) target = $region16
      $region15: #{tpu_custom_call.1} parent=11 // pred_region
        _
      $region16: #{tpu_custom_call.1} parent=11 // pred_fallthru
        _
      // Predicated region
      $region17: #{tpu_custom_call.1} parent=11 // pred_check
        %p135 = pneg %p91
      $region18: #{tpu_custom_call.1} parent=11 // pred_check_branch
        %137 = sbr.rel (%p135) target = $region20
      $region19: #{tpu_custom_call.1} parent=11 // pred_region
        _
      $region20: #{tpu_custom_call.1} parent=11 // pred_fallthru
        _
    $region12: #{tpu_custom_call.1} parent=5 // pred_fallthru
      _
    %p138 = scmp.lt.s32.totalorder %s9, 4
    // Predicated region
    $region21: #{tpu_custom_call.1} parent=5 // pred_check
      %p139 = pneg %p138
    $region22: #{tpu_custom_call.1} parent=5 // pred_check_branch
      %141 = sbr.rel (%p139) target = $region24
    $region23: #{tpu_custom_call.1} parent=5 // pred_region
      // Predicated region
      $region25: #{tpu_custom_call.1} parent=23 // pred_check
        %p142 = pneg %p43
      $region26: #{tpu_custom_call.1} parent=23 // pred_check_branch
        %144 = sbr.rel (%p142) target = $region28
      $region27: #{tpu_custom_call.1} parent=23 // pred_region
        %p145 = scmp.lt.s32.totalorder %s16, 1
        %s146 = scalar_select %p145, %s16, 1
        %p147 = scmp.lt.s32.totalorder %s17, 1
        %s148 = scalar_select %p147, %s17, 1
        %s149 = smul.addr %s146, 2
        %s150 = sadd.s32 %s148, %s149
        %s151 = smul.addr %s150, 4
        %s152 = scalar_lea.vmem %s0, %s151
      $region28: #{tpu_custom_call.1} parent=23 // pred_fallthru
        _
    $region24: #{tpu_custom_call.1} parent=5 // pred_fallthru
      _
    %p153 = scmp.le.s32.totalorder 1, %s9
    %p154 = scmp.lt.s32.totalorder %s9, 5
    %p155 = pnand %p153, %p154
    %p156 = pneg %p155
    // Predicated region
    $region29: #{tpu_custom_call.1} parent=5 // pred_check
      _
    $region30: #{tpu_custom_call.1} parent=5 // pred_check_branch
      %158 = sbr.rel (%p155) target = $region32
    $region31: #{tpu_custom_call.1} parent=5 // pred_region
      %s159 = ssub.s32 %s9, 1
      %p160 = scmp.lt.s32.totalorder %s18, 1
      %s161 = scalar_select %p160, %s18, 1
      %p162 = scmp.lt.s32.totalorder %s19, 1
      %s163 = scalar_select %p162, %s19, 1
      %s164 = smul.addr %s161, 2
      %s165 = sadd.s32 %s163, %s164
      %s166 = smul.addr %s165, 4
      %s167 = scalar_lea.vmem %s0, %s166
      %p168 = pneg %p49
      %p169 = pneg %p46
      %p170 = pneg %p70
      %p171 = pneg %p67
      %p172 = pneg %p91
      %p173 = pneg %p88
      %p174 = pneg %p117
      %p175 = pneg %p114
      %p176 = scmp.lt.s32.totalorder %s18, 1
      %s177 = scalar_select %p176, %s18, 1
      %s178 = smul.addr %s177, 16
      %s179 = smul.addr %s178, 8
      %s180 = scalar_lea.vmem %s3, %s179
      %p181 = scmp.lt.s32.totalorder %s18, 1
      %s182 = scalar_select %p181, %s18, 1
      %p183 = scmp.lt.s32.totalorder %s19, 1
      %s184 = scalar_select %p183, %s19, 1
      %s185 = smul.addr %s182, 2
      %s186 = sadd.s32 %s184, %s185
      %s187 = smul.addr %s186, 4
      %s188 = scalar_lea.vmem %s0, %s187
      %p189 = scmp.lt.s32.totalorder %s18, 1
      %s190 = scalar_select %p189, %s18, 1
      %s191 = smul.addr %s190, 16
      %s192 = smul.addr %s191, 8
      %s193 = scalar_lea.vmem %s3, %s192
      %p195 = scmp.eq.s32.totalorder %s19, 0
      // Predicated region
      $region33: #{tpu_custom_call.1} parent=31 // pred_check
        %p196 = pneg %p195
      $region34: #{tpu_custom_call.1} parent=31 // pred_check_branch
        %198 = sbr.rel (%p196) target = $region36
      $region35: #{tpu_custom_call.1} parent=31 // pred_region
        %199 = vst [vmem:[#allocation2] sm:$0xff] 0.0
        %200 = vst [vmem:[#allocation2 + $0x8] sm:$0xff] 0.0
        %201 = vst [vmem:[#allocation2 + $0x10] sm:$0xff] 0.0
        %202 = vst [vmem:[#allocation2 + $0x18] sm:$0xff] 0.0
        %203 = vst [vmem:[#allocation2 + $0x20] sm:$0xff] 0.0
        %204 = vst [vmem:[#allocation2 + $0x28] sm:$0xff] 0.0
        %205 = vst [vmem:[#allocation2 + $0x30] sm:$0xff] 0.0
        %206 = vst [vmem:[#allocation2 + $0x38] sm:$0xff] 0.0
        %207 = vst [vmem:[#allocation2 + $0x40] sm:$0xff] 0.0
        %208 = vst [vmem:[#allocation2 + $0x48] sm:$0xff] 0.0
        %209 = vst [vmem:[#allocation2 + $0x50] sm:$0xff] 0.0
        %210 = vst [vmem:[#allocation2 + $0x58] sm:$0xff] 0.0
        %211 = vst [vmem:[#allocation2 + $0x60] sm:$0xff] 0.0
        %212 = vst [vmem:[#allocation2 + $0x68] sm:$0xff] 0.0
        %213 = vst [vmem:[#allocation2 + $0x70] sm:$0xff] 0.0
        %214 = vst [vmem:[#allocation2 + $0x78] sm:$0xff] 0.0
      $region36: #{tpu_custom_call.1} parent=31 // pred_fallthru
        _
      %v215 = vld [vmem:[%s188] sm:$0x7]
      %v216 = vpack.c.bf16 %v215, %v215
      %v217 = vld [vmem:[%s1] sm:$0xf]
      %v218 = vld [vmem:[%s1 + $0x4] sm:$0xf]
      %v219 = vld [vmem:[%s1 + $0x8] sm:$0xf]
      %v220 = vld [vmem:[%s1 + $0xc] sm:$0xf]
      %v221 = vld [vmem:[%s1 + $0x10] sm:$0xf]
      %v222 = vld [vmem:[%s1 + $0x14] sm:$0xf]
      %v223 = vld [vmem:[%s1 + $0x18] sm:$0xf]
      %v224 = vld [vmem:[%s1 + $0x1c] sm:$0xf]
      %v225 = vld [vmem:[%s1 + $0x20] sm:$0xf]
      %v226 = vld [vmem:[%s1 + $0x24] sm:$0xf]
      %v227 = vld [vmem:[%s1 + $0x28] sm:$0xf]
      %v228 = vld [vmem:[%s1 + $0x2c] sm:$0xf]
      %v229 = vld [vmem:[%s1 + $0x30] sm:$0xf]
      %v230 = vld [vmem:[%s1 + $0x34] sm:$0xf]
      %v231 = vld [vmem:[%s1 + $0x38] sm:$0xf]
      %v232 = vld [vmem:[%s1 + $0x3c] sm:$0xf]
      %v233 = vld [vmem:[%s2] sm:$0xff]
      %v234 = vld [vmem:[%s2 + $0x8] sm:$0xff]
      %v235 = vld [vmem:[%s2 + $0x10] sm:$0xff]
      %v236 = vld [vmem:[%s2 + $0x18] sm:$0xff]
      %v237 = vld [vmem:[%s2 + $0x20] sm:$0xff]
      %v238 = vld [vmem:[%s2 + $0x28] sm:$0xff]
      %v239 = vld [vmem:[%s2 + $0x30] sm:$0xff]
      %v240 = vld [vmem:[%s2 + $0x38] sm:$0xff]
      %v241 = vld [vmem:[%s2 + $0x40] sm:$0xff]
      %v242 = vld [vmem:[%s2 + $0x48] sm:$0xff]
      %v243 = vld [vmem:[%s2 + $0x50] sm:$0xff]
      %v244 = vld [vmem:[%s2 + $0x58] sm:$0xff]
      %v245 = vld [vmem:[%s2 + $0x60] sm:$0xff]
      %v246 = vld [vmem:[%s2 + $0x68] sm:$0xff]
      %v247 = vld [vmem:[%s2 + $0x70] sm:$0xff]
      %v248 = vld [vmem:[%s2 + $0x78] sm:$0xff]
      %250 = vset.pattern.permute.xlu0 0
      %251 = vperm.xlu0 %250, %v233
      %v252 = vpop.permute.xlu0 %251
      %255 = vset.pattern.permute.xlu0 0
      %256 = vperm.xlu0 %255, %v234
      %v257 = vpop.permute.xlu0 %256
      %260 = vset.pattern.permute.xlu0 0
      %261 = vperm.xlu0 %260, %v235
      %v262 = vpop.permute.xlu0 %261
      %265 = vset.pattern.permute.xlu0 0
      %266 = vperm.xlu0 %265, %v236
      %v267 = vpop.permute.xlu0 %266
      %270 = vset.pattern.permute.xlu0 0
      %271 = vperm.xlu0 %270, %v237
      %v272 = vpop.permute.xlu0 %271
      %275 = vset.pattern.permute.xlu0 0
      %276 = vperm.xlu0 %275, %v238
      %v277 = vpop.permute.xlu0 %276
      %280 = vset.pattern.permute.xlu0 0
      %281 = vperm.xlu0 %280, %v239
      %v282 = vpop.permute.xlu0 %281
      %285 = vset.pattern.permute.xlu0 0
      %286 = vperm.xlu0 %285, %v240
      %v287 = vpop.permute.xlu0 %286
      %290 = vset.pattern.permute.xlu0 0
      %291 = vperm.xlu0 %290, %v241
      %v292 = vpop.permute.xlu0 %291
      %295 = vset.pattern.permute.xlu0 0
      %296 = vperm.xlu0 %295, %v242
      %v297 = vpop.permute.xlu0 %296
      %300 = vset.pattern.permute.xlu0 0
      %301 = vperm.xlu0 %300, %v243
      %v302 = vpop.permute.xlu0 %301
      %305 = vset.pattern.permute.xlu0 0
      %306 = vperm.xlu0 %305, %v244
      %v307 = vpop.permute.xlu0 %306
      %310 = vset.pattern.permute.xlu0 0
      %311 = vperm.xlu0 %310, %v245
      %v312 = vpop.permute.xlu0 %311
      %315 = vset.pattern.permute.xlu0 0
      %316 = vperm.xlu0 %315, %v246
      %v317 = vpop.permute.xlu0 %316
      %320 = vset.pattern.permute.xlu0 0
      %321 = vperm.xlu0 %320, %v247
      %v322 = vpop.permute.xlu0 %321
      %325 = vset.pattern.permute.xlu0 0
      %326 = vperm.xlu0 %325, %v248
      %v327 = vpop.permute.xlu0 %326
      %v345 = vunpack.c.l.b16 %v217
      %v346 = vunpack.c.l.b16 %v218
      %v347 = vunpack.c.l.b16 %v219
      %v348 = vunpack.c.l.b16 %v220
      %v349 = vunpack.c.l.b16 %v221
      %v350 = vunpack.c.l.b16 %v222
      %v351 = vunpack.c.l.b16 %v223
      %v352 = vunpack.c.l.b16 %v224
      %v353 = vunpack.c.l.b16 %v225
      %v354 = vunpack.c.l.b16 %v226
      %v355 = vunpack.c.l.b16 %v227
      %v356 = vunpack.c.l.b16 %v228
      %v357 = vunpack.c.l.b16 %v229
      %v358 = vunpack.c.l.b16 %v230
      %v359 = vunpack.c.l.b16 %v231
      %v360 = vunpack.c.l.b16 %v232
      %v361 = vpack.c.b16 %v346, %v345
      %v362 = vpack.c.b16 %v348, %v347
      %v363 = vpack.c.b16 %v350, %v349
      %v364 = vpack.c.b16 %v352, %v351
      %v365 = vpack.c.b16 %v354, %v353
      %v366 = vpack.c.b16 %v356, %v355
      %v367 = vpack.c.b16 %v358, %v357
      %v368 = vpack.c.b16 %v360, %v359
      %vm369 = vcmask 23552
      %v371 = vsel %vm369, %v361, 0
      %v374 = vsel %vm369, %v362, 0
      %v377 = vsel %vm369, %v363, 0
      %v380 = vsel %vm369, %v364, 0
      %v383 = vsel %vm369, %v365, 0
      %v386 = vsel %vm369, %v366, 0
      %v389 = vsel %vm369, %v367, 0
      %v392 = vsel %vm369, %v368, 0
      %vm394 = vcmask 1040384
      %vm395 = vcmask 1041408
      %v396 = vsel %vm394, 4294967295, 65535
      %v397 = vsel %vm395, %v396, 0
      %v399 = vand.u32 %v216, %v397
      %401 = vmatprep.subr.bf16.mxu0 0
      %402 = vmatpush1.bf16.msra.mxu0 0
      %403 = vmatprep.subr.bf16.mxu0 0
      %404 = vmatpush1.bf16.msra.mxu0 0
      %405 = vmatprep.subr.bf16.mxu0 0
      %406 = vmatpush1.bf16.msra.mxu0 0
      %407 = vmatprep.subr.bf16.mxu0 0
      %408 = vmatpush1.bf16.msra.mxu0 0
      %409 = vmatprep.subr.bf16.mxu0 0
      %410 = vmatpush1.bf16.msra.mxu0 0
      %411 = vmatprep.subr.bf16.mxu0 0
      %412 = vmatpush1.bf16.msra.mxu0 0
      %413 = vmatprep.subr.bf16.mxu0 0
      %414 = vmatpush1.bf16.msra.mxu0 0
      %415 = vmatprep.subr.bf16.mxu0 0
      %416 = vmatpush1.bf16.msra.mxu0 %v399
      %417 = vmatprep.subr.bf16.mxu0 0
      %418 = vmatpush2.bf16.msra.mxu0 0
      %419 = vmatprep.subr.bf16.mxu0 0
      %420 = vmatpush2.bf16.msra.mxu0 0
      %421 = vmatprep.subr.bf16.mxu0 0
      %422 = vmatpush2.bf16.msra.mxu0 0
      %423 = vmatprep.subr.bf16.mxu0 0
      %424 = vmatpush2.bf16.msra.mxu0 0
      %425 = vmatprep.subr.bf16.mxu0 0
      %426 = vmatpush2.bf16.msra.mxu0 0
      %427 = vmatprep.subr.bf16.mxu0 0
      %428 = vmatpush2.bf16.msra.mxu0 0
      %429 = vmatprep.subr.bf16.mxu0 0
      %430 = vmatpush2.bf16.msra.mxu0 0
      %431 = vmatprep.subr.bf16.mxu0 0
      %432 = vmatpush2.bf16.msra.mxu0 0
      %433 = vmatprep.mubr.bf16.mxu0 0
      %434 = vmatmul.mubr.bf16.gmra.mxu0 %v371
      %v435 = vpop.f32.mrf.mxu0
      %v436 = vadd.f32 %v252, %v435
      %v437 = vpop.f32.mrf.mxu0
      %v438 = vpop.f32.mrf.mxu0
      %v439 = vadd.f32 %v257, %v438
      %v440 = vpop.f32.mrf.mxu0
      %441 = vmatprep.mubr.bf16.mxu0 0
      %442 = vmatmul.mubr.bf16.gmra.mxu0 %v374
      %v443 = vpop.f32.mrf.mxu0
      %v444 = vadd.f32 %v262, %v443
      %v445 = vpop.f32.mrf.mxu0
      %v446 = vpop.f32.mrf.mxu0
      %v447 = vadd.f32 %v267, %v446
      %v448 = vpop.f32.mrf.mxu0
      %449 = vmatprep.mubr.bf16.mxu0 0
      %450 = vmatmul.mubr.bf16.gmra.mxu0 %v377
      %v451 = vpop.f32.mrf.mxu0
      %v452 = vadd.f32 %v272, %v451
      %v453 = vpop.f32.mrf.mxu0
      %v454 = vpop.f32.mrf.mxu0
      %v455 = vadd.f32 %v277, %v454
      %v456 = vpop.f32.mrf.mxu0
      %457 = vmatprep.mubr.bf16.mxu0 0
      %458 = vmatmul.mubr.bf16.gmra.mxu0 %v380
      %v459 = vpop.f32.mrf.mxu0
      %v460 = vadd.f32 %v282, %v459
      %v461 = vpop.f32.mrf.mxu0
      %v462 = vpop.f32.mrf.mxu0
      %v463 = vadd.f32 %v287, %v462
      %v464 = vpop.f32.mrf.mxu0
      %465 = vmatprep.mubr.bf16.mxu0 0
      %466 = vmatmul.mubr.bf16.gmra.mxu0 %v383
      %v467 = vpop.f32.mrf.mxu0
      %v468 = vadd.f32 %v292, %v467
      %v469 = vpop.f32.mrf.mxu0
      %v470 = vpop.f32.mrf.mxu0
      %v471 = vadd.f32 %v297, %v470
      %v472 = vpop.f32.mrf.mxu0
      %473 = vmatprep.mubr.bf16.mxu0 0
      %474 = vmatmul.mubr.bf16.gmra.mxu0 %v386
      %v475 = vpop.f32.mrf.mxu0
      %v476 = vadd.f32 %v302, %v475
      %v477 = vpop.f32.mrf.mxu0
      %v478 = vpop.f32.mrf.mxu0
      %v479 = vadd.f32 %v307, %v478
      %v480 = vpop.f32.mrf.mxu0
      %481 = vmatprep.mubr.bf16.mxu0 0
      %482 = vmatmul.mubr.bf16.gmra.mxu0 %v389
      %v483 = vpop.f32.mrf.mxu0
      %v484 = vadd.f32 %v312, %v483
      %v485 = vpop.f32.mrf.mxu0
      %v486 = vpop.f32.mrf.mxu0
      %v487 = vadd.f32 %v317, %v486
      %v488 = vpop.f32.mrf.mxu0
      %489 = vmatprep.mubr.bf16.mxu0 0
      %490 = vmatmul.mubr.bf16.gmra.mxu0 %v392
      %v491 = vpop.f32.mrf.mxu0
      %v492 = vadd.f32 %v322, %v491
      %v493 = vpop.f32.mrf.mxu0
      %v494 = vpop.f32.mrf.mxu0
      %v495 = vadd.f32 %v327, %v494
      %v496 = vpop.f32.mrf.mxu0
      %497 = vdwg.mxu0
      %v498 = vmax.f32 %v436, 0.0
      %v499 = vmax.f32 %v439, 0.0
      %v500 = vmax.f32 %v444, 0.0
      %v501 = vmax.f32 %v447, 0.0
      %v502 = vmax.f32 %v452, 0.0
      %v503 = vmax.f32 %v455, 0.0
      %v504 = vmax.f32 %v460, 0.0
      %v505 = vmax.f32 %v463, 0.0
      %v506 = vmax.f32 %v468, 0.0
      %v507 = vmax.f32 %v471, 0.0
      %v508 = vmax.f32 %v476, 0.0
      %v509 = vmax.f32 %v479, 0.0
      %v510 = vmax.f32 %v484, 0.0
      %v511 = vmax.f32 %v487, 0.0
      %v512 = vmax.f32 %v492, 0.0
      %v513 = vmax.f32 %v495, 0.0
      %v514 = vld [vmem:[#allocation2] sm:$0xff]
      %v515 = vld [vmem:[#allocation2 + $0x8] sm:$0xff]
      %v516 = vld [vmem:[#allocation2 + $0x10] sm:$0xff]
      %v517 = vld [vmem:[#allocation2 + $0x18] sm:$0xff]
      %v518 = vld [vmem:[#allocation2 + $0x20] sm:$0xff]
      %v519 = vld [vmem:[#allocation2 + $0x28] sm:$0xff]
      %v520 = vld [vmem:[#allocation2 + $0x30] sm:$0xff]
      %v521 = vld [vmem:[#allocation2 + $0x38] sm:$0xff]
      %v522 = vld [vmem:[#allocation2 + $0x40] sm:$0xff]
      %v523 = vld [vmem:[#allocation2 + $0x48] sm:$0xff]
      %v524 = vld [vmem:[#allocation2 + $0x50] sm:$0xff]
      %v525 = vld [vmem:[#allocation2 + $0x58] sm:$0xff]
      %v526 = vld [vmem:[#allocation2 + $0x60] sm:$0xff]
      %v527 = vld [vmem:[#allocation2 + $0x68] sm:$0xff]
      %v528 = vld [vmem:[#allocation2 + $0x70] sm:$0xff]
      %v529 = vld [vmem:[#allocation2 + $0x78] sm:$0xff]
      %v530 = vadd.f32 %v514, %v498
      %v531 = vadd.f32 %v515, %v499
      %v532 = vadd.f32 %v516, %v500
      %v533 = vadd.f32 %v517, %v501
      %v534 = vadd.f32 %v518, %v502
      %v535 = vadd.f32 %v519, %v503
      %v536 = vadd.f32 %v520, %v504
      %v537 = vadd.f32 %v521, %v505
      %v538 = vadd.f32 %v522, %v506
      %v539 = vadd.f32 %v523, %v507
      %v540 = vadd.f32 %v524, %v508
      %v541 = vadd.f32 %v525, %v509
      %v542 = vadd.f32 %v526, %v510
      %v543 = vadd.f32 %v527, %v511
      %v544 = vadd.f32 %v528, %v512
      %v545 = vadd.f32 %v529, %v513
      %546 = vst [vmem:[#allocation2] sm:$0xff] %v530
      %547 = vst [vmem:[#allocation2 + $0x8] sm:$0xff] %v531
      %548 = vst [vmem:[#allocation2 + $0x10] sm:$0xff] %v532
      %549 = vst [vmem:[#allocation2 + $0x18] sm:$0xff] %v533
      %550 = vst [vmem:[#allocation2 + $0x20] sm:$0xff] %v534
      %551 = vst [vmem:[#allocation2 + $0x28] sm:$0xff] %v535
      %552 = vst [vmem:[#allocation2 + $0x30] sm:$0xff] %v536
      %553 = vst [vmem:[#allocation2 + $0x38] sm:$0xff] %v537
      %554 = vst [vmem:[#allocation2 + $0x40] sm:$0xff] %v538
      %555 = vst [vmem:[#allocation2 + $0x48] sm:$0xff] %v539
      %556 = vst [vmem:[#allocation2 + $0x50] sm:$0xff] %v540
      %557 = vst [vmem:[#allocation2 + $0x58] sm:$0xff] %v541
      %558 = vst [vmem:[#allocation2 + $0x60] sm:$0xff] %v542
      %559 = vst [vmem:[#allocation2 + $0x68] sm:$0xff] %v543
      %560 = vst [vmem:[#allocation2 + $0x70] sm:$0xff] %v544
      %561 = vst [vmem:[#allocation2 + $0x78] sm:$0xff] %v545
      %p562 = scmp.eq.s32.totalorder %s19, 1
      // Predicated region
      $region37: #{tpu_custom_call.1} parent=31 // pred_check
        %p563 = pneg %p562
      $region38: #{tpu_custom_call.1} parent=31 // pred_check_branch
        %565 = sbr.rel (%p563) target = $region40
      $region39: #{tpu_custom_call.1} parent=31 // pred_region
        %v566 = vld [vmem:[#allocation2] sm:$0xff]
        %v567 = vld [vmem:[#allocation2 + $0x8] sm:$0xff]
        %v568 = vld [vmem:[#allocation2 + $0x10] sm:$0xff]
        %v569 = vld [vmem:[#allocation2 + $0x18] sm:$0xff]
        %v570 = vld [vmem:[#allocation2 + $0x20] sm:$0xff]
        %v571 = vld [vmem:[#allocation2 + $0x28] sm:$0xff]
        %v572 = vld [vmem:[#allocation2 + $0x30] sm:$0xff]
        %v573 = vld [vmem:[#allocation2 + $0x38] sm:$0xff]
        %v574 = vld [vmem:[#allocation2 + $0x40] sm:$0xff]
        %v575 = vld [vmem:[#allocation2 + $0x48] sm:$0xff]
        %v576 = vld [vmem:[#allocation2 + $0x50] sm:$0xff]
        %v577 = vld [vmem:[#allocation2 + $0x58] sm:$0xff]
        %v578 = vld [vmem:[#allocation2 + $0x60] sm:$0xff]
        %v579 = vld [vmem:[#allocation2 + $0x68] sm:$0xff]
        %v580 = vld [vmem:[#allocation2 + $0x70] sm:$0xff]
        %v581 = vld [vmem:[#allocation2 + $0x78] sm:$0xff]
        %582 = vadd.xlane.f32.xlu0 %v566
        %v583 = vpop.xlane.xlu0 %582
        %584 = vadd.xlane.f32.xlu0 %v567
        %v585 = vpop.xlane.xlu0 %584
        %586 = vadd.xlane.f32.xlu0 %v568
        %v587 = vpop.xlane.xlu0 %586
        %588 = vadd.xlane.f32.xlu0 %v569
        %v589 = vpop.xlane.xlu0 %588
        %590 = vadd.xlane.f32.xlu0 %v570
        %v591 = vpop.xlane.xlu0 %590
        %592 = vadd.xlane.f32.xlu0 %v571
        %v593 = vpop.xlane.xlu0 %592
        %594 = vadd.xlane.f32.xlu0 %v572
        %v595 = vpop.xlane.xlu0 %594
        %596 = vadd.xlane.f32.xlu0 %v573
        %v597 = vpop.xlane.xlu0 %596
        %598 = vadd.xlane.f32.xlu0 %v574
        %v599 = vpop.xlane.xlu0 %598
        %600 = vadd.xlane.f32.xlu0 %v575
        %v601 = vpop.xlane.xlu0 %600
        %602 = vadd.xlane.f32.xlu0 %v576
        %v603 = vpop.xlane.xlu0 %602
        %604 = vadd.xlane.f32.xlu0 %v577
        %v605 = vpop.xlane.xlu0 %604
        %606 = vadd.xlane.f32.xlu0 %v578
        %v607 = vpop.xlane.xlu0 %606
        %608 = vadd.xlane.f32.xlu0 %v579
        %v609 = vpop.xlane.xlu0 %608
        %610 = vadd.xlane.f32.xlu0 %v580
        %v611 = vpop.xlane.xlu0 %610
        %612 = vadd.xlane.f32.xlu0 %v581
        %v613 = vpop.xlane.xlu0 %612
        %v614 = vmul.f32 %v583, 0.00390625
        %v615 = vmul.f32 %v585, 0.00390625
        %v616 = vmul.f32 %v587, 0.00390625
        %v617 = vmul.f32 %v589, 0.00390625
        %v618 = vmul.f32 %v591, 0.00390625
        %v619 = vmul.f32 %v593, 0.00390625
        %v620 = vmul.f32 %v595, 0.00390625
        %v621 = vmul.f32 %v597, 0.00390625
        %v622 = vmul.f32 %v599, 0.00390625
        %v623 = vmul.f32 %v601, 0.00390625
        %v624 = vmul.f32 %v603, 0.00390625
        %v625 = vmul.f32 %v605, 0.00390625
        %v626 = vmul.f32 %v607, 0.00390625
        %v627 = vmul.f32 %v609, 0.00390625
        %v628 = vmul.f32 %v611, 0.00390625
        %v629 = vmul.f32 %v613, 0.00390625
        %vm630 = vcmask 7168
        %631 = vst.msk [vmem:[%s193] sm:$0xff] %vm630, %v614
        %632 = vst.msk [vmem:[%s193 + $0x8] sm:$0xff] %vm630, %v615
        %633 = vst.msk [vmem:[%s193 + $0x10] sm:$0xff] %vm630, %v616
        %634 = vst.msk [vmem:[%s193 + $0x18] sm:$0xff] %vm630, %v617
        %635 = vst.msk [vmem:[%s193 + $0x20] sm:$0xff] %vm630, %v618
        %636 = vst.msk [vmem:[%s193 + $0x28] sm:$0xff] %vm630, %v619
        %637 = vst.msk [vmem:[%s193 + $0x30] sm:$0xff] %vm630, %v620
        %638 = vst.msk [vmem:[%s193 + $0x38] sm:$0xff] %vm630, %v621
        %639 = vst.msk [vmem:[%s193 + $0x40] sm:$0xff] %vm630, %v622
        %640 = vst.msk [vmem:[%s193 + $0x48] sm:$0xff] %vm630, %v623
        %641 = vst.msk [vmem:[%s193 + $0x50] sm:$0xff] %vm630, %v624
        %642 = vst.msk [vmem:[%s193 + $0x58] sm:$0xff] %vm630, %v625
        %643 = vst.msk [vmem:[%s193 + $0x60] sm:$0xff] %vm630, %v626
        %644 = vst.msk [vmem:[%s193 + $0x68] sm:$0xff] %vm630, %v627
        %645 = vst.msk [vmem:[%s193 + $0x70] sm:$0xff] %vm630, %v628
        %646 = vst.msk [vmem:[%s193 + $0x78] sm:$0xff] %vm630, %v629
      $region40: #{tpu_custom_call.1} parent=31 // pred_fallthru
        _
      %p647 = scmp.lt.s32.totalorder %s18, 1
      %s648 = scalar_select %p647, %s18, 1
      %s649 = smul.addr %s648, 16
      %s650 = smul.addr %s649, 8
      %s651 = scalar_lea.vmem %s3, %s650
      // Predicated region
      $region41: #{tpu_custom_call.1} parent=31 // pred_check
        %p652 = pneg %p114
      $region42: #{tpu_custom_call.1} parent=31 // pred_check_branch
        %654 = sbr.rel (%p652) target = $region44
      $region43: #{tpu_custom_call.1} parent=31 // pred_region
        _
      $region44: #{tpu_custom_call.1} parent=31 // pred_fallthru
        _
    $region32: #{tpu_custom_call.1} parent=5 // pred_fallthru
      _
    %p655 = scmp.le.s32.totalorder 2, %s9
    // Predicated region
    $region45: #{tpu_custom_call.1} parent=5 // pred_check
      %p656 = pneg %p655
    $region46: #{tpu_custom_call.1} parent=5 // pred_check_branch
      %658 = sbr.rel (%p656) target = $region48
    $region47: #{tpu_custom_call.1} parent=5 // pred_region
      %s659 = ssub.s32 %s9, 2
      // Predicated region
      $region49: #{tpu_custom_call.1} parent=47 // pred_check
        %p660 = pneg %p120
      $region50: #{tpu_custom_call.1} parent=47 // pred_check_branch
        %662 = sbr.rel (%p660) target = $region52
      $region51: #{tpu_custom_call.1} parent=47 // pred_region
        %p663 = scmp.lt.s32.totalorder %s20, 1
        %s664 = scalar_select %p663, %s20, 1
        %s665 = smul.addr %s664, 16
        %s666 = smul.addr %s665, 8
        %s667 = scalar_lea.vmem %s3, %s666
      $region52: #{tpu_custom_call.1} parent=47 // pred_fallthru
        _
    $region48: #{tpu_custom_call.1} parent=5 // pred_fallthru
      _
  $region6: #{tpu_custom_call.1} parent=0 // loop_footer
    %s13 = sadd.s32 1, %s9
  $region7: #{tpu_custom_call.1} parent=0 // loop_footer_branch
    %8 = sbr.rel target = $region3
  $region8: #{tpu_custom_call.1} parent=0 // loop_exit
    _

</llo_original>
